<compile_context>
chip_gen: v6e
topology: v6e:2x2x1
jax: 0.10.0
libtpu: 0.0.40
codegen_flags: <defaults>
</compile_context>

<pallas_src>
import functools

import jax
import jax.numpy as jnp
from jax.experimental import pallas as pl
from jax.experimental.pallas import tpu as pltpu

NEG_SLOPE = 0.01  # PyTorch nn.LeakyReLU default

# Original / padded layer sizes.
D_IN = 784
H_RAW, H_PAD = 200, 256       # hidden: 200 -> 256 (2 full lanes-of-128)
O_RAW, O_PAD = 10, 128        # output: 10  -> 128 (1 full lane-of-128)


def _leaky_relu(x):
    return jnp.where(x >= 0, x, NEG_SLOPE * x)


def mlp_kernel(x_ref, w1_ref, b1_ref, w2_ref, b2_ref, w3_ref, b3_ref, o_ref):
    # Layer 1: (TM, 784)bf16 @ (784, 256)bf16 -> f32 acc
    h = jnp.dot(x_ref[...], w1_ref[...], preferred_element_type=jnp.float32)
    h = _leaky_relu(h + b1_ref[...])                      # f32 epilogue on VPU
    # Layer 2: (TM, 256) @ (256, 256)
    h = jnp.dot(h.astype(jnp.bfloat16), w2_ref[...],
                preferred_element_type=jnp.float32)
    h = _leaky_relu(h + b2_ref[...])
    # Layer 3: (TM, 256) @ (256, 128)
    h = jnp.dot(h.astype(jnp.bfloat16), w3_ref[...],
                preferred_element_type=jnp.float32)
    h = _leaky_relu(h + b3_ref[...])
    o_ref[...] = h.astype(o_ref.dtype)                    # lane-dense (TM, 128) store


def pad_and_cast_params(params):
    """Zero-pad feature dims to lane multiples; weights -> bf16, biases -> f32."""
    w1, b1, w2, b2, w3, b3 = params
    w1p = jnp.pad(w1, ((0, 0), (0, H_PAD - H_RAW))).astype(jnp.bfloat16)
    b1p = jnp.pad(b1, ((0, 0), (0, H_PAD - H_RAW))).astype(jnp.float32)
    w2p = jnp.pad(w2, ((0, H_PAD - H_RAW), (0, H_PAD - H_RAW))).astype(jnp.bfloat16)
    b2p = jnp.pad(b2, ((0, 0), (0, H_PAD - H_RAW))).astype(jnp.float32)
    w3p = jnp.pad(w3, ((0, H_PAD - H_RAW), (0, O_PAD - O_RAW))).astype(jnp.bfloat16)
    b3p = jnp.pad(b3, ((0, 0), (0, O_PAD - O_RAW))).astype(jnp.float32)
    return w1p, b1p, w2p, b2p, w3p, b3p


@functools.partial(jax.jit, static_argnames=("tm",))
def mlp_forward(x, padded_params, *, tm=256):
    """x: (B, 784) f32.  Returns (B, 10) f32."""
    w1, b1, w2, b2, w3, b3 = padded_params
    B = x.shape[0]

    # Batch tiling: pad B up to a multiple of the batch tile TM (TM itself is
    # capped at the 8-aligned batch so tiny batches run a single grid step).
    b8 = ((B + 7) // 8) * 8
    tm = min(tm, b8)
    grid_m = pl.cdiv(b8, tm)
    b_pad = grid_m * tm
    x_p = jnp.pad(x, ((0, b_pad - B), (0, 0))).astype(jnp.bfloat16)

    flops = 2 * b_pad * (D_IN * H_PAD + H_PAD * H_PAD + H_PAD * O_PAD)
    bytes_accessed = (
        2 * (D_IN * H_PAD + H_PAD * H_PAD + H_PAD * O_PAD)   # bf16 weights
        + 4 * (H_PAD + H_PAD + O_PAD)                        # f32 biases
        + 2 * b_pad * D_IN                                   # bf16 x
        + 4 * b_pad * O_PAD                                  # f32 out
    )

    out = pl.pallas_call(
        mlp_kernel,
        out_shape=jax.ShapeDtypeStruct((b_pad, O_PAD), jnp.float32),
        grid_spec=pltpu.PrefetchScalarGridSpec(
            num_scalar_prefetch=0,
            grid=(grid_m,),
            in_specs=[
                pl.BlockSpec((tm, D_IN), lambda i: (i, 0)),       # x tile
                pl.BlockSpec((D_IN, H_PAD), lambda i: (0, 0)),    # W1 (resident)
                pl.BlockSpec((1, H_PAD), lambda i: (0, 0)),       # b1
                pl.BlockSpec((H_PAD, H_PAD), lambda i: (0, 0)),   # W2
                pl.BlockSpec((1, H_PAD), lambda i: (0, 0)),       # b2
                pl.BlockSpec((H_PAD, O_PAD), lambda i: (0, 0)),   # W3
                pl.BlockSpec((1, O_PAD), lambda i: (0, 0)),       # b3
            ],
            out_specs=pl.BlockSpec((tm, O_PAD), lambda i: (i, 0)),
        ),
        compiler_params=pltpu.CompilerParams(
            dimension_semantics=("parallel",)),
        cost_estimate=pl.CostEstimate(
            flops=flops, transcendentals=0, bytes_accessed=bytes_accessed),
    )(x_p, w1, b1, w2, b2, w3, b3)

    return out[:B, :O_RAW]


def init_params(key):
    # Deterministic synthetic init (PyTorch-like uniform fan-in scaling).
    dims = [(D_IN, H_RAW), (H_RAW, H_RAW), (H_RAW, O_RAW)]
    params = []
    for i, (fan_in, fan_out) in enumerate(dims):
        kw, kb = jax.random.split(jax.random.fold_in(key, i))
        bound = 1.0 / jnp.sqrt(fan_in)
        w = jax.random.uniform(kw, (fan_in, fan_out), jnp.float32, -bound, bound)
        b = jax.random.uniform(kb, (1, fan_out), jnp.float32, -bound, bound)
        params += [w, b]
    return tuple(params)


def mlp_reference(x, params):
    w1, b1, w2, b2, w3, b3 = params
    h = _leaky_relu(x @ w1 + b1)
    h = _leaky_relu(h @ w2 + b2)
    h = _leaky_relu(h @ w3 + b3)
    return h


if __name__ == "__main__":
    key = jax.random.PRNGKey(0)
    kx, kp = jax.random.split(key)
    B = 8
    x = jax.random.normal(kx, (B, D_IN), jnp.float32)
    params = init_params(kp)
    padded_params = pad_and_cast_params(params)

    out = mlp_forward(x, padded_params)
    jax.block_until_ready(out)

    ref = mlp_reference(x, params)  # full-f32 reference
    assert out.shape == (B, O_RAW), out.shape
    # bf16 weights/activations on the MXU vs f32 reference -> loose tolerance.
    assert jnp.allclose(out, ref, atol=2e-2, rtol=2e-2), (
        "mismatch vs reference: max abs diff = "
        f"{float(jnp.max(jnp.abs(out - ref)))}")
    print("KERNEL_OK")
</pallas_src>

<mosaic_0001>
module attributes {stable_mosaic.version = 11 : i64} {
  func.func @mlp_kernel(%arg0: i32, %arg1: memref<8x784xbf16, #tpu.memory_space<vmem>>, %arg2: memref<784x256xbf16, #tpu.memory_space<vmem>>, %arg3: memref<1x256xf32, #tpu.memory_space<vmem>>, %arg4: memref<256x256xbf16, #tpu.memory_space<vmem>>, %arg5: memref<1x256xf32, #tpu.memory_space<vmem>>, %arg6: memref<256x128xbf16, #tpu.memory_space<vmem>>, %arg7: memref<1x128xf32, #tpu.memory_space<vmem>>, %arg8: memref<8x128xf32, #tpu.memory_space<vmem>>) attributes {dimension_semantics = [#tpu.dimension_semantics<parallel>], iteration_bounds = array<i64: 1>, scalar_prefetch = 0 : i64, scratch_operands = 0 : i64, tpu.core_type = #tpu.core_type<tc>, window_params = [{transform_indices = @transform_0, window_bounds = array<i64: 8, 784>}, {pipeline_mode = #tpu.pipeline_mode<synchronous>, transform_indices = @transform_1, window_bounds = array<i64: 784, 256>}, {pipeline_mode = #tpu.pipeline_mode<synchronous>, transform_indices = @transform_2, window_bounds = array<i64: 1, 256>}, {pipeline_mode = #tpu.pipeline_mode<synchronous>, transform_indices = @transform_3, window_bounds = array<i64: 256, 256>}, {pipeline_mode = #tpu.pipeline_mode<synchronous>, transform_indices = @transform_4, window_bounds = array<i64: 1, 256>}, {pipeline_mode = #tpu.pipeline_mode<synchronous>, transform_indices = @transform_5, window_bounds = array<i64: 256, 128>}, {pipeline_mode = #tpu.pipeline_mode<synchronous>, transform_indices = @transform_6, window_bounds = array<i64: 1, 128>}, {transform_indices = @transform_7, window_bounds = array<i64: 8, 128>}]} {
    %c0 = arith.constant 0 : index
    %c0_0 = arith.constant 0 : index
    %0 = vector.load %arg1[%c0, %c0_0] : memref<8x784xbf16, #tpu.memory_space<vmem>>, vector<8x784xbf16>
    %c0_1 = arith.constant 0 : index
    %c0_2 = arith.constant 0 : index
    %1 = vector.load %arg2[%c0_1, %c0_2] : memref<784x256xbf16, #tpu.memory_space<vmem>>, vector<784x256xbf16>
    %cst = arith.constant dense<0.000000e+00> : vector<8x256xf32>
    %2 = tpu.matmul %0, %1, %cst {dimension_numbers = #tpu.dot_dimension_numbers<[1], [0], [0], [1], [0, 0, 1, 1], [], []>} : vector<8x784xbf16>, vector<784x256xbf16>, vector<8x256xf32> -> vector<8x256xf32>
    %c0_3 = arith.constant 0 : index
    %c0_4 = arith.constant 0 : index
    %3 = vector.load %arg3[%c0_3, %c0_4] : memref<1x256xf32, #tpu.memory_space<vmem>>, vector<1x256xf32>
    %4 = vector.broadcast %3 : vector<1x256xf32> to vector<8x256xf32>
    %5 = arith.addf %2, %4 : vector<8x256xf32>
    %cst_5 = arith.constant 0.000000e+00 : f32
    %6 = vector.broadcast %cst_5 : f32 to vector<8x256xf32>
    %7 = arith.cmpf oge, %5, %6 : vector<8x256xf32>
    %cst_6 = arith.constant 0.00999999977 : f32
    %8 = vector.broadcast %cst_6 : f32 to vector<8x256xf32>
    %9 = arith.mulf %8, %5 : vector<8x256xf32>
    %10 = arith.select %7, %5, %9 : vector<8x256xi1>, vector<8x256xf32>
    %11 = arith.truncf %10 : vector<8x256xf32> to vector<8x256xbf16>
    %c0_7 = arith.constant 0 : index
    %c0_8 = arith.constant 0 : index
    %12 = vector.load %arg4[%c0_7, %c0_8] : memref<256x256xbf16, #tpu.memory_space<vmem>>, vector<256x256xbf16>
    %cst_9 = arith.constant dense<0.000000e+00> : vector<8x256xf32>
    %13 = tpu.matmul %11, %12, %cst_9 {dimension_numbers = #tpu.dot_dimension_numbers<[1], [0], [0], [1], [0, 0, 1, 1], [], []>} : vector<8x256xbf16>, vector<256x256xbf16>, vector<8x256xf32> -> vector<8x256xf32>
    %c0_10 = arith.constant 0 : index
    %c0_11 = arith.constant 0 : index
    %14 = vector.load %arg5[%c0_10, %c0_11] : memref<1x256xf32, #tpu.memory_space<vmem>>, vector<1x256xf32>
    %15 = vector.broadcast %14 : vector<1x256xf32> to vector<8x256xf32>
    %16 = arith.addf %13, %15 : vector<8x256xf32>
    %cst_12 = arith.constant 0.000000e+00 : f32
    %17 = vector.broadcast %cst_12 : f32 to vector<8x256xf32>
    %18 = arith.cmpf oge, %16, %17 : vector<8x256xf32>
    %cst_13 = arith.constant 0.00999999977 : f32
    %19 = vector.broadcast %cst_13 : f32 to vector<8x256xf32>
    %20 = arith.mulf %19, %16 : vector<8x256xf32>
    %21 = arith.select %18, %16, %20 : vector<8x256xi1>, vector<8x256xf32>
    %22 = arith.truncf %21 : vector<8x256xf32> to vector<8x256xbf16>
    %c0_14 = arith.constant 0 : index
    %c0_15 = arith.constant 0 : index
    %23 = vector.load %arg6[%c0_14, %c0_15] : memref<256x128xbf16, #tpu.memory_space<vmem>>, vector<256x128xbf16>
    %cst_16 = arith.constant dense<0.000000e+00> : vector<8x128xf32>
    %24 = tpu.matmul %22, %23, %cst_16 {dimension_numbers = #tpu.dot_dimension_numbers<[1], [0], [0], [1], [0, 0, 1, 1], [], []>} : vector<8x256xbf16>, vector<256x128xbf16>, vector<8x128xf32> -> vector<8x128xf32>
    %c0_17 = arith.constant 0 : index
    %c0_18 = arith.constant 0 : index
    %25 = vector.load %arg7[%c0_17, %c0_18] : memref<1x128xf32, #tpu.memory_space<vmem>>, vector<1x128xf32>
    %26 = vector.broadcast %25 : vector<1x128xf32> to vector<8x128xf32>
    %27 = arith.addf %24, %26 : vector<8x128xf32>
    %cst_19 = arith.constant 0.000000e+00 : f32
    %28 = vector.broadcast %cst_19 : f32 to vector<8x128xf32>
    %29 = arith.cmpf oge, %27, %28 : vector<8x128xf32>
    %cst_20 = arith.constant 0.00999999977 : f32
    %30 = vector.broadcast %cst_20 : f32 to vector<8x128xf32>
    %31 = arith.mulf %30, %27 : vector<8x128xf32>
    %32 = arith.select %29, %27, %31 : vector<8x128xi1>, vector<8x128xf32>
    %c0_21 = arith.constant 0 : index
    %c0_22 = arith.constant 0 : index
    %33 = vector.load %arg8[%c0_21, %c0_22] : memref<8x128xf32, #tpu.memory_space<vmem>>, vector<8x128xf32>
    tpu.vector_store %arg8[%c0_21, %c0_22], %32 {strides = array<i32>} : memref<8x128xf32, #tpu.memory_space<vmem>>, vector<8x128xf32>,
    return
  }
  func.func @transform_0(%arg0: i32) -> (i32, i32) {
    %c0_i32 = arith.constant 0 : i32
    %c0_i32_0 = arith.constant 0 : i32
    return %arg0, %c0_i32 : i32, i32
  }
  func.func @transform_1(%arg0: i32) -> (i32, i32) {
    %c0_i32 = arith.constant 0 : i32
    %c0_i32_0 = arith.constant 0 : i32
    %c0_i32_1 = arith.constant 0 : i32
    return %c0_i32, %c0_i32_0 : i32, i32
  }
  func.func @transform_2(%arg0: i32) -> (i32, i32) {
    %c0_i32 = arith.constant 0 : i32
    %c0_i32_0 = arith.constant 0 : i32
    %c0_i32_1 = arith.constant 0 : i32
    return %c0_i32, %c0_i32_0 : i32, i32
  }
  func.func @transform_3(%arg0: i32) -> (i32, i32) {
    %c0_i32 = arith.constant 0 : i32
    %c0_i32_0 = arith.constant 0 : i32
    %c0_i32_1 = arith.constant 0 : i32
    return %c0_i32, %c0_i32_0 : i32, i32
  }
  func.func @transform_4(%arg0: i32) -> (i32, i32) {
    %c0_i32 = arith.constant 0 : i32
    %c0_i32_0 = arith.constant 0 : i32
    %c0_i32_1 = arith.constant 0 : i32
    return %c0_i32, %c0_i32_0 : i32, i32
  }
  func.func @transform_5(%arg0: i32) -> (i32, i32) {
    %c0_i32 = arith.constant 0 : i32
    %c0_i32_0 = arith.constant 0 : i32
    %c0_i32_1 = arith.constant 0 : i32
    return %c0_i32, %c0_i32_0 : i32, i32
  }
  func.func @transform_6(%arg0: i32) -> (i32, i32) {
    %c0_i32 = arith.constant 0 : i32
    %c0_i32_0 = arith.constant 0 : i32
    %c0_i32_1 = arith.constant 0 : i32
    return %c0_i32, %c0_i32_0 : i32, i32
  }
  func.func @transform_7(%arg0: i32) -> (i32, i32) {
    %c0_i32 = arith.constant 0 : i32
    %c0_i32_0 = arith.constant 0 : i32
    return %arg0, %c0_i32 : i32, i32
  }
}

</mosaic_0001>

<llo_original>
// kernel: mlp_forward.1
$region0: #{mlp_forward.1}
  #allocation0 [shape = 'u32[]', space=smem, size = 0x4, offset = 0x4, fixed_abs, tag = 'smem constant byte address 0x4 - core index']
  #allocation1 [shape = 'u32[144,128]{1,0:T(1,128)}', space=vmem, size = 0x12000, scoped, tag = 'internal scratch']
  %s0 = inlined_call_operand.vmem [shape: bf16[8,784], index: 0, kind: input, shape index: {}]
  %s1 = inlined_call_operand.hbm [shape: bf16[784,256], index: 1, kind: input, shape index: {}]
  %s2 = inlined_call_operand.vmem [shape: f32[1,256], index: 2, kind: input, shape index: {}]
  %s3 = inlined_call_operand.hbm [shape: bf16[256,256], index: 3, kind: input, shape index: {}]
  %s4 = inlined_call_operand.vmem [shape: f32[1,256], index: 4, kind: input, shape index: {}]
  %s5 = inlined_call_operand.hbm [shape: bf16[256,128], index: 5, kind: input, shape index: {}]
  %s6 = inlined_call_operand.vmem [shape: f32[1,128], index: 6, kind: input, shape index: {}]
  %s7 = inlined_call_operand.hbm [shape: f32[8,128], index: 7, kind: output, shape index: {}]
  %s8 = sld [smem:[#allocation0]]
  $region50: #{mlp_forward.1} parent=0
    _
  %s10 = ssub.s32 1, %s8
  %s11 = scalar_select 0, %s10, %s8
  $region1: #{mlp_forward.1} parent=0
    #allocation2 [shape = 'u8[401408]{0}', space=vmem, size = 0x62000, scoped, tag = 'input window, operand 1, single buffered']
    #allocation3 [shape = 's32[1]{0}', space=sflag, size = 0x4, scoped, tag = 'scoped memory for mlp_forward.1']
    #allocation4 [shape = 's32[1]{0}', space=sflag, size = 0x4, scoped, tag = 'scoped memory for mlp_forward.1']
    #allocation5 [shape = 'u8[131072]{0}', space=vmem, size = 0x20000, scoped, tag = 'input window, operand 3, single buffered']
    #allocation6 [shape = 's32[1]{0}', space=sflag, size = 0x4, scoped, tag = 'scoped memory for mlp_forward.1']
    #allocation7 [shape = 'u8[65536]{0}', space=vmem, size = 0x10000, scoped, tag = 'input window, operand 5, single buffered']
    #allocation8 [shape = 'u8[4096]{0}', space=vmem, size = 0x1000, scoped, tag = 'output window, operand 0, single buffered']
    %12 = vsyncpa [#allocation3], 0
    %13 = vsyncpa [#allocation6], 0
    %14 = vsyncpa [#allocation4], 0
    // Predicated region
    $region2: #{mlp_forward.1} parent=1 // pred_check
      _
    $region3: #{mlp_forward.1} parent=1 // pred_check_branch
      %16 = sbr.rel (0) target = $region5
    $region4: #{mlp_forward.1} parent=1 // pred_region
      _
    $region5: #{mlp_forward.1} parent=1 // pred_fallthru
      _
    // Predicated region
    $region6: #{mlp_forward.1} parent=1 // pred_check
      _
    $region7: #{mlp_forward.1} parent=1 // pred_check_branch
      %18 = sbr.rel (0) target = $region9
    $region8: #{mlp_forward.1} parent=1 // pred_region
      %s20 = ssub.s32 12544, 12544
      %21 = vsyncadd [#allocation3], %s20
      %s22 = sshll.u32 [#allocation2], 4
      %s23 = int_to_ptr.vmem [resolvable:$true] %s22
      %28 = dma.hbm_to_vmem [thread:$0]  %s1, 12544, %s23, [#allocation3], 128, 128, 8
    $region9: #{mlp_forward.1} parent=1 // pred_fallthru
      _
    // Predicated region
    $region10: #{mlp_forward.1} parent=1 // pred_check
      _
    $region11: #{mlp_forward.1} parent=1 // pred_check_branch
      %30 = sbr.rel (0) target = $region13
    $region12: #{mlp_forward.1} parent=1 // pred_region
      _
    $region13: #{mlp_forward.1} parent=1 // pred_fallthru
      _
    // Predicated region
    $region14: #{mlp_forward.1} parent=1 // pred_check
      _
    $region15: #{mlp_forward.1} parent=1 // pred_check_branch
      %32 = sbr.rel (0) target = $region17
    $region16: #{mlp_forward.1} parent=1 // pred_region
      %s34 = ssub.s32 4096, 4096
      %35 = vsyncadd [#allocation6], %s34
      %s36 = sshll.u32 [#allocation5], 4
      %s37 = int_to_ptr.vmem [resolvable:$true] %s36
      %42 = dma.hbm_to_vmem [thread:$0]  %s3, 4096, %s37, [#allocation6], 128, 128, 8
    $region17: #{mlp_forward.1} parent=1 // pred_fallthru
      _
    // Predicated region
    $region18: #{mlp_forward.1} parent=1 // pred_check
      _
    $region19: #{mlp_forward.1} parent=1 // pred_check_branch
      %44 = sbr.rel (0) target = $region21
    $region20: #{mlp_forward.1} parent=1 // pred_region
      _
    $region21: #{mlp_forward.1} parent=1 // pred_fallthru
      _
    // Predicated region
    $region22: #{mlp_forward.1} parent=1 // pred_check
      _
    $region23: #{mlp_forward.1} parent=1 // pred_check_branch
      %46 = sbr.rel (0) target = $region25
    $region24: #{mlp_forward.1} parent=1 // pred_region
      %s48 = ssub.s32 2048, 2048
      %49 = vsyncadd [#allocation6], %s48
      %s50 = sshll.u32 [#allocation7], 4
      %s51 = int_to_ptr.vmem [resolvable:$true] %s50
      %56 = dma.hbm_to_vmem [thread:$0]  %s5, 2048, %s51, [#allocation6], 64, 64, 4
    $region25: #{mlp_forward.1} parent=1 // pred_fallthru
      _
    // Predicated region
    $region26: #{mlp_forward.1} parent=1 // pred_check
      _
    $region27: #{mlp_forward.1} parent=1 // pred_check_branch
      %58 = sbr.rel (0) target = $region29
    $region28: #{mlp_forward.1} parent=1 // pred_region
      _
    $region29: #{mlp_forward.1} parent=1 // pred_fallthru
      _
    // Predicated region
    $region30: #{mlp_forward.1} parent=1 // pred_check
      _
    $region31: #{mlp_forward.1} parent=1 // pred_check_branch
      %60 = sbr.rel (0) target = $region33
    $region32: #{mlp_forward.1} parent=1 // pred_region
      %61 = dma.done [#allocation3], 12544
    $region33: #{mlp_forward.1} parent=1 // pred_fallthru
      _
    // Predicated region
    $region34: #{mlp_forward.1} parent=1 // pred_check
      _
    $region35: #{mlp_forward.1} parent=1 // pred_check_branch
      %63 = sbr.rel (0) target = $region37
    $region36: #{mlp_forward.1} parent=1 // pred_region
      %64 = dma.done [#allocation6], 4096
    $region37: #{mlp_forward.1} parent=1 // pred_fallthru
      _
    // Predicated region
    $region38: #{mlp_forward.1} parent=1 // pred_check
      _
    $region39: #{mlp_forward.1} parent=1 // pred_check_branch
      %66 = sbr.rel (0) target = $region41
    $region40: #{mlp_forward.1} parent=1 // pred_region
      %67 = dma.done [#allocation6], 2048
    $region41: #{mlp_forward.1} parent=1 // pred_fallthru
      _
    %v69 = vld [vmem:[%s0] sm:$0xff]
    %v70 = vld [vmem:[%s0 + $0x8] sm:$0xff]
    %v71 = vld [vmem:[%s0 + $0x10] sm:$0xff]
    %v72 = vld [vmem:[%s0 + $0x18] sm:$0xf]
    %v73 = vld [vmem:[#allocation2] sm:$0xff]
    %v74 = vld [vmem:[#allocation2 + $0x8] sm:$0xff]
    %v75 = vld [vmem:[#allocation2 + $0x10] sm:$0xff]
    %v76 = vld [vmem:[#allocation2 + $0x18] sm:$0xff]
    %v77 = vld [vmem:[#allocation2 + $0x20] sm:$0xff]
    %v78 = vld [vmem:[#allocation2 + $0x28] sm:$0xff]
    %v79 = vld [vmem:[#allocation2 + $0x30] sm:$0xff]
    %v80 = vld [vmem:[#allocation2 + $0x38] sm:$0xff]
    %v81 = vld [vmem:[#allocation2 + $0x40] sm:$0xff]
    %v82 = vld [vmem:[#allocation2 + $0x48] sm:$0xff]
    %v83 = vld [vmem:[#allocation2 + $0x50] sm:$0xff]
    %v84 = vld [vmem:[#allocation2 + $0x58] sm:$0xff]
    %v85 = vld [vmem:[#allocation2 + $0x60] sm:$0xff]
    %v86 = vld [vmem:[#allocation2 + $0x68] sm:$0xff]
    %v87 = vld [vmem:[#allocation2 + $0x70] sm:$0xff]
    %v88 = vld [vmem:[#allocation2 + $0x78] sm:$0xff]
    %v89 = vld [vmem:[#allocation2 + $0x80] sm:$0xff]
    %v90 = vld [vmem:[#allocation2 + $0x88] sm:$0xff]
    %v91 = vld [vmem:[#allocation2 + $0x90] sm:$0xff]
    %v92 = vld [vmem:[#allocation2 + $0x98] sm:$0xff]
    %v93 = vld [vmem:[#allocation2 + $0xa0] sm:$0xff]
    %v94 = vld [vmem:[#allocation2 + $0xa8] sm:$0xff]
    %v95 = vld [vmem:[#allocation2 + $0xb0] sm:$0xff]
    %v96 = vld [vmem:[#allocation2 + $0xb8] sm:$0xff]
    %v97 = vld [vmem:[#allocation2 + $0xc0] sm:$0xff]
    %v98 = vld [vmem:[#allocation2 + $0xc8] sm:$0xff]
    %v99 = vld [vmem:[#allocation2 + $0xd0] sm:$0xff]
    %v100 = vld [vmem:[#allocation2 + $0xd8] sm:$0xff]
    %v101 = vld [vmem:[#allocation2 + $0xe0] sm:$0xff]
    %v102 = vld [vmem:[#allocation2 + $0xe8] sm:$0xff]
    %v103 = vld [vmem:[#allocation2 + $0xf0] sm:$0xff]
    %v104 = vld [vmem:[#allocation2 + $0xf8] sm:$0xff]
    %v105 = vld [vmem:[#allocation2 + $0x100] sm:$0xff]
    %v106 = vld [vmem:[#allocation2 + $0x108] sm:$0xff]
    %v107 = vld [vmem:[#allocation2 + $0x110] sm:$0xff]
    %v108 = vld [vmem:[#allocation2 + $0x118] sm:$0xff]
    %v109 = vld [vmem:[#allocation2 + $0x120] sm:$0xff]
    %v110 = vld [vmem:[#allocation2 + $0x128] sm:$0xff]
    %v111 = vld [vmem:[#allocation2 + $0x130] sm:$0xff]
    %v112 = vld [vmem:[#allocation2 + $0x138] sm:$0xff]
    %v113 = vld [vmem:[#allocation2 + $0x140] sm:$0xff]
    %v114 = vld [vmem:[#allocation2 + $0x148] sm:$0xff]
    %v115 = vld [vmem:[#allocation2 + $0x150] sm:$0xff]
    %v116 = vld [vmem:[#allocation2 + $0x158] sm:$0xff]
    %v117 = vld [vmem:[#allocation2 + $0x160] sm:$0xff]
    %v118 = vld [vmem:[#allocation2 + $0x168] sm:$0xff]
    %v119 = vld [vmem:[#allocation2 + $0x170] sm:$0xff]
    %v120 = vld [vmem:[#allocation2 + $0x178] sm:$0xff]
    %v121 = vld [vmem:[#allocation2 + $0x180] sm:$0xff]
    %v122 = vld [vmem:[#allocation2 + $0x188] sm:$0xff]
    %v123 = vld [vmem:[#allocation2 + $0x190] sm:$0xff]
    %v124 = vld [vmem:[#allocation2 + $0x198] sm:$0xff]
    %v125 = vld [vmem:[#allocation2 + $0x1a0] sm:$0xff]
    %v126 = vld [vmem:[#allocation2 + $0x1a8] sm:$0xff]
    %v127 = vld [vmem:[#allocation2 + $0x1b0] sm:$0xff]
    %v128 = vld [vmem:[#allocation2 + $0x1b8] sm:$0xff]
    %v129 = vld [vmem:[#allocation2 + $0x1c0] sm:$0xff]
    %v130 = vld [vmem:[#allocation2 + $0x1c8] sm:$0xff]
    %v131 = vld [vmem:[#allocation2 + $0x1d0] sm:$0xff]
    %v132 = vld [vmem:[#allocation2 + $0x1d8] sm:$0xff]
    %v133 = vld [vmem:[#allocation2 + $0x1e0] sm:$0xff]
    %v134 = vld [vmem:[#allocation2 + $0x1e8] sm:$0xff]
    %v135 = vld [vmem:[#allocation2 + $0x1f0] sm:$0xff]
    %v136 = vld [vmem:[#allocation2 + $0x1f8] sm:$0xff]
    %v137 = vld [vmem:[#allocation2 + $0x200] sm:$0xff]
    %v138 = vld [vmem:[#allocation2 + $0x208] sm:$0xff]
    %v139 = vld [vmem:[#allocation2 + $0x210] sm:$0xff]
    %v140 = vld [vmem:[#allocation2 + $0x218] sm:$0xff]
    %v141 = vld [vmem:[#allocation2 + $0x220] sm:$0xff]
    %v142 = vld [vmem:[#allocation2 + $0x228] sm:$0xff]
    %v143 = vld [vmem:[#allocation2 + $0x230] sm:$0xff]
    %v144 = vld [vmem:[#allocation2 + $0x238] sm:$0xff]
    %v145 = vld [vmem:[#allocation2 + $0x240] sm:$0xff]
    %v146 = vld [vmem:[#allocation2 + $0x248] sm:$0xff]
    %v147 = vld [vmem:[#allocation2 + $0x250] sm:$0xff]
    %v148 = vld [vmem:[#allocation2 + $0x258] sm:$0xff]
    %v149 = vld [vmem:[#allocation2 + $0x260] sm:$0xff]
    %v150 = vld [vmem:[#allocation2 + $0x268] sm:$0xff]
    %v151 = vld [vmem:[#allocation2 + $0x270] sm:$0xff]
    %v152 = vld [vmem:[#allocation2 + $0x278] sm:$0xff]
    %v153 = vld [vmem:[#allocation2 + $0x280] sm:$0xff]
    %v154 = vld [vmem:[#allocation2 + $0x288] sm:$0xff]
    %v155 = vld [vmem:[#allocation2 + $0x290] sm:$0xff]
    %v156 = vld [vmem:[#allocation2 + $0x298] sm:$0xff]
    %v157 = vld [vmem:[#allocation2 + $0x2a0] sm:$0xff]
    %v158 = vld [vmem:[#allocation2 + $0x2a8] sm:$0xff]
    %v159 = vld [vmem:[#allocation2 + $0x2b0] sm:$0xff]
    %v160 = vld [vmem:[#allocation2 + $0x2b8] sm:$0xff]
    %v161 = vld [vmem:[#allocation2 + $0x2c0] sm:$0xff]
    %v162 = vld [vmem:[#allocation2 + $0x2c8] sm:$0xff]
    %v163 = vld [vmem:[#allocation2 + $0x2d0] sm:$0xff]
    %v164 = vld [vmem:[#allocation2 + $0x2d8] sm:$0xff]
    %v165 = vld [vmem:[#allocation2 + $0x2e0] sm:$0xff]
    %v166 = vld [vmem:[#allocation2 + $0x2e8] sm:$0xff]
    %v167 = vld [vmem:[#allocation2 + $0x2f0] sm:$0xff]
    %v168 = vld [vmem:[#allocation2 + $0x2f8] sm:$0xff]
    %v169 = vld [vmem:[#allocation2 + $0x300] sm:$0xff]
    %v170 = vld [vmem:[#allocation2 + $0x308] sm:$0xff]
    %v171 = vld [vmem:[%s2] sm:$0x3]
    %v173 = vlaneseq
    %v174 = vshrl.u32 %v173, 7
    %v175 = vsub.s32 0, %v174
    %v176 = vrot.slane %v171, %v175
    %v177 = vlaneseq
    %v178 = vshrl.u32 %v177, 7
    %v179 = vsub.s32 1, %v178
    %v180 = vrot.slane %v171, %v179
    %v187 = vunpack.c.l.b16 %v69
    %v188 = vunpack.c.h.b16 %v69
    %v189 = vunpack.c.l.b16 %v70
    %v190 = vunpack.c.h.b16 %v70
    %v191 = vunpack.c.l.b16 %v71
    %v192 = vunpack.c.h.b16 %v71
    %v193 = vunpack.c.l.b16 %v72
    %v194 = vpack.c.b16 %v187, %v187
    %v195 = vpack.c.b16 %v188, %v188
    %v196 = vpack.c.b16 %v189, %v189
    %v197 = vpack.c.b16 %v190, %v190
    %v198 = vpack.c.b16 %v191, %v191
    %v199 = vpack.c.b16 %v192, %v192
    %v200 = vpack.c.b16 %v193, %v193
    %v305 = vunpack.c.l.b16 %v73
    %v306 = vunpack.c.h.b16 %v73
    %v307 = vunpack.c.l.b16 %v74
    %v308 = vunpack.c.h.b16 %v74
    %v309 = vunpack.c.l.b16 %v75
    %v310 = vunpack.c.h.b16 %v75
    %v311 = vunpack.c.l.b16 %v76
    %v312 = vunpack.c.h.b16 %v76
    %v313 = vunpack.c.l.b16 %v77
    %v314 = vunpack.c.h.b16 %v77
    %v315 = vunpack.c.l.b16 %v78
    %v316 = vunpack.c.h.b16 %v78
    %v317 = vunpack.c.l.b16 %v79
    %v318 = vunpack.c.h.b16 %v79
    %v319 = vunpack.c.l.b16 %v80
    %v320 = vunpack.c.h.b16 %v80
    %v321 = vunpack.c.l.b16 %v81
    %v322 = vunpack.c.h.b16 %v81
    %v323 = vunpack.c.l.b16 %v82
    %v324 = vunpack.c.h.b16 %v82
    %v325 = vunpack.c.l.b16 %v83
    %v326 = vunpack.c.h.b16 %v83
    %v327 = vunpack.c.l.b16 %v84
    %v328 = vunpack.c.h.b16 %v84
    %v329 = vunpack.c.l.b16 %v85
    %v330 = vunpack.c.h.b16 %v85
    %v331 = vunpack.c.l.b16 %v86
    %v332 = vunpack.c.h.b16 %v86
    %v333 = vunpack.c.l.b16 %v87
    %v334 = vunpack.c.h.b16 %v87
    %v335 = vunpack.c.l.b16 %v88
    %v336 = vunpack.c.h.b16 %v88
    %v337 = vunpack.c.l.b16 %v89
    %v338 = vunpack.c.h.b16 %v89
    %v339 = vunpack.c.l.b16 %v90
    %v340 = vunpack.c.h.b16 %v90
    %v341 = vunpack.c.l.b16 %v91
    %v342 = vunpack.c.h.b16 %v91
    %v343 = vunpack.c.l.b16 %v92
    %v344 = vunpack.c.h.b16 %v92
    %v345 = vunpack.c.l.b16 %v93
    %v346 = vunpack.c.h.b16 %v93
    %v347 = vunpack.c.l.b16 %v94
    %v348 = vunpack.c.h.b16 %v94
    %v349 = vunpack.c.l.b16 %v95
    %v350 = vunpack.c.h.b16 %v95
    %v351 = vunpack.c.l.b16 %v96
    %v352 = vunpack.c.h.b16 %v96
    %v353 = vunpack.c.l.b16 %v97
    %v354 = vunpack.c.h.b16 %v97
    %v355 = vunpack.c.l.b16 %v98
    %v356 = vunpack.c.h.b16 %v98
    %v357 = vunpack.c.l.b16 %v99
    %v358 = vunpack.c.h.b16 %v99
    %v359 = vunpack.c.l.b16 %v100
    %v360 = vunpack.c.h.b16 %v100
    %v361 = vunpack.c.l.b16 %v101
    %v362 = vunpack.c.h.b16 %v101
    %v363 = vunpack.c.l.b16 %v102
    %v364 = vunpack.c.h.b16 %v102
    %v365 = vunpack.c.l.b16 %v103
    %v366 = vunpack.c.h.b16 %v103
    %v367 = vunpack.c.l.b16 %v104
    %v368 = vunpack.c.h.b16 %v104
    %v369 = vunpack.c.l.b16 %v105
    %v370 = vunpack.c.h.b16 %v105
    %v371 = vunpack.c.l.b16 %v106
    %v372 = vunpack.c.h.b16 %v106
    %v373 = vunpack.c.l.b16 %v107
    %v374 = vunpack.c.h.b16 %v107
    %v375 = vunpack.c.l.b16 %v108
    %v376 = vunpack.c.h.b16 %v108
    %v377 = vunpack.c.l.b16 %v109
    %v378 = vunpack.c.h.b16 %v109
    %v379 = vunpack.c.l.b16 %v110
    %v380 = vunpack.c.h.b16 %v110
    %v381 = vunpack.c.l.b16 %v111
    %v382 = vunpack.c.h.b16 %v111
    %v383 = vunpack.c.l.b16 %v112
    %v384 = vunpack.c.h.b16 %v112
    %v385 = vunpack.c.l.b16 %v113
    %v386 = vunpack.c.h.b16 %v113
    %v387 = vunpack.c.l.b16 %v114
    %v388 = vunpack.c.h.b16 %v114
    %v389 = vunpack.c.l.b16 %v115
    %v390 = vunpack.c.h.b16 %v115
    %v391 = vunpack.c.l.b16 %v116
    %v392 = vunpack.c.h.b16 %v116
    %v393 = vunpack.c.l.b16 %v117
    %v394 = vunpack.c.h.b16 %v117
    %v395 = vunpack.c.l.b16 %v118
    %v396 = vunpack.c.h.b16 %v118
    %v397 = vunpack.c.l.b16 %v119
    %v398 = vunpack.c.h.b16 %v119
    %v399 = vunpack.c.l.b16 %v120
    %v400 = vunpack.c.h.b16 %v120
    %v401 = vunpack.c.l.b16 %v121
    %v402 = vunpack.c.h.b16 %v121
    %v403 = vunpack.c.l.b16 %v122
    %v404 = vunpack.c.h.b16 %v122
    %v405 = vunpack.c.l.b16 %v123
    %v406 = vunpack.c.h.b16 %v123
    %v407 = vunpack.c.l.b16 %v124
    %v408 = vunpack.c.h.b16 %v124
    %v409 = vunpack.c.l.b16 %v125
    %v410 = vunpack.c.h.b16 %v125
    %v411 = vunpack.c.l.b16 %v126
    %v412 = vunpack.c.h.b16 %v126
    %v413 = vunpack.c.l.b16 %v127
    %v414 = vunpack.c.h.b16 %v127
    %v415 = vunpack.c.l.b16 %v128
    %v416 = vunpack.c.h.b16 %v128
    %v417 = vunpack.c.l.b16 %v129
    %v418 = vunpack.c.h.b16 %v129
    %v419 = vunpack.c.l.b16 %v130
    %v420 = vunpack.c.h.b16 %v130
    %v421 = vunpack.c.l.b16 %v131
    %v422 = vunpack.c.h.b16 %v131
    %v423 = vunpack.c.l.b16 %v132
    %v424 = vunpack.c.h.b16 %v132
    %v425 = vunpack.c.l.b16 %v133
    %v426 = vunpack.c.h.b16 %v133
    %v427 = vunpack.c.l.b16 %v134
    %v428 = vunpack.c.h.b16 %v134
    %v429 = vunpack.c.l.b16 %v135
    %v430 = vunpack.c.h.b16 %v135
    %v431 = vunpack.c.l.b16 %v136
    %v432 = vunpack.c.h.b16 %v136
    %v433 = vunpack.c.l.b16 %v137
    %v434 = vunpack.c.h.b16 %v137
    %v435 = vunpack.c.l.b16 %v138
    %v436 = vunpack.c.h.b16 %v138
    %v437 = vunpack.c.l.b16 %v139
    %v438 = vunpack.c.h.b16 %v139
    %v439 = vunpack.c.l.b16 %v140
    %v440 = vunpack.c.h.b16 %v140
    %v441 = vunpack.c.l.b16 %v141
    %v442 = vunpack.c.h.b16 %v141
    %v443 = vunpack.c.l.b16 %v142
    %v444 = vunpack.c.h.b16 %v142
    %v445 = vunpack.c.l.b16 %v143
    %v446 = vunpack.c.h.b16 %v143
    %v447 = vunpack.c.l.b16 %v144
    %v448 = vunpack.c.h.b16 %v144
    %v449 = vunpack.c.l.b16 %v145
    %v450 = vunpack.c.h.b16 %v145
    %v451 = vunpack.c.l.b16 %v146
    %v452 = vunpack.c.h.b16 %v146
    %v453 = vunpack.c.l.b16 %v147
    %v454 = vunpack.c.h.b16 %v147
    %v455 = vunpack.c.l.b16 %v148
    %v456 = vunpack.c.h.b16 %v148
    %v457 = vunpack.c.l.b16 %v149
    %v458 = vunpack.c.h.b16 %v149
    %v459 = vunpack.c.l.b16 %v150
    %v460 = vunpack.c.h.b16 %v150
    %v461 = vunpack.c.l.b16 %v151
    %v462 = vunpack.c.h.b16 %v151
    %v463 = vunpack.c.l.b16 %v152
    %v464 = vunpack.c.h.b16 %v152
    %v465 = vunpack.c.l.b16 %v153
    %v466 = vunpack.c.h.b16 %v153
    %v467 = vunpack.c.l.b16 %v154
    %v468 = vunpack.c.h.b16 %v154
    %v469 = vunpack.c.l.b16 %v155
    %v470 = vunpack.c.h.b16 %v155
    %v471 = vunpack.c.l.b16 %v156
    %v472 = vunpack.c.h.b16 %v156
    %v473 = vunpack.c.l.b16 %v157
    %v474 = vunpack.c.h.b16 %v157
    %v475 = vunpack.c.l.b16 %v158
    %v476 = vunpack.c.h.b16 %v158
    %v477 = vunpack.c.l.b16 %v159
    %v478 = vunpack.c.h.b16 %v159
    %v479 = vunpack.c.l.b16 %v160
    %v480 = vunpack.c.h.b16 %v160
    %v481 = vunpack.c.l.b16 %v161
    %v482 = vunpack.c.h.b16 %v161
    %v483 = vunpack.c.l.b16 %v162
    %v484 = vunpack.c.h.b16 %v162
    %v485 = vunpack.c.l.b16 %v163
    %v486 = vunpack.c.h.b16 %v163
    %v487 = vunpack.c.l.b16 %v164
    %v488 = vunpack.c.h.b16 %v164
    %v489 = vunpack.c.l.b16 %v165
    %v490 = vunpack.c.h.b16 %v165
    %v491 = vunpack.c.l.b16 %v166
    %v492 = vunpack.c.h.b16 %v166
    %v493 = vunpack.c.l.b16 %v167
    %v494 = vunpack.c.h.b16 %v167
    %v495 = vunpack.c.l.b16 %v168
    %v496 = vunpack.c.h.b16 %v168
    %v497 = vunpack.c.l.b16 %v169
    %v498 = vunpack.c.h.b16 %v169
    %v499 = vunpack.c.l.b16 %v170
    %v500 = vunpack.c.h.b16 %v170
    %v501 = vpack.c.b16 %v307, %v305
    %v502 = vpack.c.b16 %v308, %v306
    %v503 = vpack.c.b16 %v311, %v309
    %v504 = vpack.c.b16 %v312, %v310
    %v505 = vpack.c.b16 %v315, %v313
    %v506 = vpack.c.b16 %v316, %v314
    %v507 = vpack.c.b16 %v319, %v317
    %v508 = vpack.c.b16 %v320, %v318
    %v509 = vpack.c.b16 %v323, %v321
    %v510 = vpack.c.b16 %v324, %v322
    %v511 = vpack.c.b16 %v327, %v325
    %v512 = vpack.c.b16 %v328, %v326
    %v513 = vpack.c.b16 %v331, %v329
    %v514 = vpack.c.b16 %v332, %v330
    %v515 = vpack.c.b16 %v335, %v333
    %v516 = vpack.c.b16 %v336, %v334
    %v517 = vpack.c.b16 %v339, %v337
    %v518 = vpack.c.b16 %v340, %v338
    %v519 = vpack.c.b16 %v343, %v341
    %v520 = vpack.c.b16 %v344, %v342
    %v521 = vpack.c.b16 %v347, %v345
    %v522 = vpack.c.b16 %v348, %v346
    %v523 = vpack.c.b16 %v351, %v349
    %v524 = vpack.c.b16 %v352, %v350
    %v525 = vpack.c.b16 %v355, %v353
    %v526 = vpack.c.b16 %v356, %v354
    %v527 = vpack.c.b16 %v359, %v357
    %v528 = vpack.c.b16 %v360, %v358
    %v529 = vpack.c.b16 %v363, %v361
    %v530 = vpack.c.b16 %v364, %v362
    %v531 = vpack.c.b16 %v367, %v365
    %v532 = vpack.c.b16 %v368, %v366
    %v533 = vpack.c.b16 %v371, %v369
    %v534 = vpack.c.b16 %v372, %v370
    %v535 = vpack.c.b16 %v375, %v373
    %v536 = vpack.c.b16 %v376, %v374
    %v537 = vpack.c.b16 %v379, %v377
    %v538 = vpack.c.b16 %v380, %v378
    %v539 = vpack.c.b16 %v383, %v381
    %v540 = vpack.c.b16 %v384, %v382
    %v541 = vpack.c.b16 %v387, %v385
    %v542 = vpack.c.b16 %v388, %v386
    %v543 = vpack.c.b16 %v391, %v389
    %v544 = vpack.c.b16 %v392, %v390
    %v545 = vpack.c.b16 %v395, %v393
    %v546 = vpack.c.b16 %v396, %v394
    %v547 = vpack.c.b16 %v399, %v397
    %v548 = vpack.c.b16 %v400, %v398
    %v549 = vpack.c.b16 %v403, %v401
    %v550 = vpack.c.b16 %v404, %v402
    %v551 = vpack.c.b16 %v407, %v405
    %v552 = vpack.c.b16 %v408, %v406
    %v553 = vpack.c.b16 %v411, %v409
    %v554 = vpack.c.b16 %v412, %v410
    %v555 = vpack.c.b16 %v415, %v413
    %v556 = vpack.c.b16 %v416, %v414
    %v557 = vpack.c.b16 %v419, %v417
    %v558 = vpack.c.b16 %v420, %v418
    %v559 = vpack.c.b16 %v423, %v421
    %v560 = vpack.c.b16 %v424, %v422
    %v561 = vpack.c.b16 %v427, %v425
    %v562 = vpack.c.b16 %v428, %v426
    %v563 = vpack.c.b16 %v431, %v429
    %v564 = vpack.c.b16 %v432, %v430
    %v565 = vpack.c.b16 %v435, %v433
    %v566 = vpack.c.b16 %v436, %v434
    %v567 = vpack.c.b16 %v439, %v437
    %v568 = vpack.c.b16 %v440, %v438
    %v569 = vpack.c.b16 %v443, %v441
    %v570 = vpack.c.b16 %v444, %v442
    %v571 = vpack.c.b16 %v447, %v445
    %v572 = vpack.c.b16 %v448, %v446
    %v573 = vpack.c.b16 %v451, %v449
    %v574 = vpack.c.b16 %v452, %v450
    %v575 = vpack.c.b16 %v455, %v453
    %v576 = vpack.c.b16 %v456, %v454
    %v577 = vpack.c.b16 %v459, %v457
    %v578 = vpack.c.b16 %v460, %v458
    %v579 = vpack.c.b16 %v463, %v461
    %v580 = vpack.c.b16 %v464, %v462
    %v581 = vpack.c.b16 %v467, %v465
    %v582 = vpack.c.b16 %v468, %v466
    %v583 = vpack.c.b16 %v471, %v469
    %v584 = vpack.c.b16 %v472, %v470
    %v585 = vpack.c.b16 %v475, %v473
    %v586 = vpack.c.b16 %v476, %v474
    %v587 = vpack.c.b16 %v479, %v477
    %v588 = vpack.c.b16 %v480, %v478
    %v589 = vpack.c.b16 %v483, %v481
    %v590 = vpack.c.b16 %v484, %v482
    %v591 = vpack.c.b16 %v487, %v485
    %v592 = vpack.c.b16 %v488, %v486
    %v593 = vpack.c.b16 %v491, %v489
    %v594 = vpack.c.b16 %v492, %v490
    %v595 = vpack.c.b16 %v495, %v493
    %v596 = vpack.c.b16 %v496, %v494
    %v597 = vpack.c.b16 %v499, %v497
    %v598 = vpack.c.b16 %v500, %v498
    %vm697 = vcmask 130048
    %v699 = vsel %vm697, %v200, 0
    %701 = vmatprep.subr.bf16.mxu0 %v516
    %702 = vmatpush1.bf16.msra.mxu0 %v515
    %703 = vmatprep.subr.bf16.mxu0 %v514
    %704 = vmatpush1.bf16.msra.mxu0 %v513
    %705 = vmatprep.subr.bf16.mxu0 %v512
    %706 = vmatpush1.bf16.msra.mxu0 %v511
    %707 = vmatprep.subr.bf16.mxu0 %v510
    %708 = vmatpush1.bf16.msra.mxu0 %v509
    %709 = vmatprep.subr.bf16.mxu0 %v508
    %710 = vmatpush1.bf16.msra.mxu0 %v507
    %711 = vmatprep.subr.bf16.mxu0 %v506
    %712 = vmatpush1.bf16.msra.mxu0 %v505
    %713 = vmatprep.subr.bf16.mxu0 %v504
    %714 = vmatpush1.bf16.msra.mxu0 %v503
    %715 = vmatprep.subr.bf16.mxu0 %v502
    %716 = vmatpush1.bf16.msra.mxu0 %v501
    %717 = vmatprep.subr.bf16.mxu0 %v532
    %718 = vmatpush2.bf16.msra.mxu0 %v531
    %719 = vmatprep.subr.bf16.mxu0 %v530
    %720 = vmatpush2.bf16.msra.mxu0 %v529
    %721 = vmatprep.subr.bf16.mxu0 %v528
    %722 = vmatpush2.bf16.msra.mxu0 %v527
    %723 = vmatprep.subr.bf16.mxu0 %v526
    %724 = vmatpush2.bf16.msra.mxu0 %v525
    %725 = vmatprep.subr.bf16.mxu0 %v524
    %726 = vmatpush2.bf16.msra.mxu0 %v523
    %727 = vmatprep.subr.bf16.mxu0 %v522
    %728 = vmatpush2.bf16.msra.mxu0 %v521
    %729 = vmatprep.subr.bf16.mxu0 %v520
    %730 = vmatpush2.bf16.msra.mxu0 %v519
    %731 = vmatprep.subr.bf16.mxu0 %v518
    %732 = vmatpush2.bf16.msra.mxu0 %v517
    %733 = vmatprep.mubr.bf16.mxu0 %v195
    %734 = vmatmul.mubr.bf16.gmra.mxu0 %v194
    %v735 = vpop.f32.mrf.mxu0
    %v736 = vadd.f32 %v176, %v735
    %v737 = vpop.f32.mrf.mxu0
    %v738 = vadd.f32 %v180, %v737
    %v739 = vpop.f32.mrf.mxu0
    %v740 = vpop.f32.mrf.mxu0
    %741 = vdwg.mxu0
    %742 = vmatprep.subr.bf16.mxu0 %v548
    %743 = vmatpush1.bf16.msra.mxu0 %v547
    %744 = vmatprep.subr.bf16.mxu0 %v546
    %745 = vmatpush1.bf16.msra.mxu0 %v545
    %746 = vmatprep.subr.bf16.mxu0 %v544
    %747 = vmatpush1.bf16.msra.mxu0 %v543
    %748 = vmatprep.subr.bf16.mxu0 %v542
    %749 = vmatpush1.bf16.msra.mxu0 %v541
    %750 = vmatprep.subr.bf16.mxu0 %v540
    %751 = vmatpush1.bf16.msra.mxu0 %v539
    %752 = vmatprep.subr.bf16.mxu0 %v538
    %753 = vmatpush1.bf16.msra.mxu0 %v537
    %754 = vmatprep.subr.bf16.mxu0 %v536
    %755 = vmatpush1.bf16.msra.mxu0 %v535
    %756 = vmatprep.subr.bf16.mxu0 %v534
    %757 = vmatpush1.bf16.msra.mxu0 %v533
    %758 = vmatprep.subr.bf16.mxu0 %v564
    %759 = vmatpush2.bf16.msra.mxu0 %v563
    %760 = vmatprep.subr.bf16.mxu0 %v562
    %761 = vmatpush2.bf16.msra.mxu0 %v561
    %762 = vmatprep.subr.bf16.mxu0 %v560
    %763 = vmatpush2.bf16.msra.mxu0 %v559
    %764 = vmatprep.subr.bf16.mxu0 %v558
    %765 = vmatpush2.bf16.msra.mxu0 %v557
    %766 = vmatprep.subr.bf16.mxu0 %v556
    %767 = vmatpush2.bf16.msra.mxu0 %v555
    %768 = vmatprep.subr.bf16.mxu0 %v554
    %769 = vmatpush2.bf16.msra.mxu0 %v553
    %770 = vmatprep.subr.bf16.mxu0 %v552
    %771 = vmatpush2.bf16.msra.mxu0 %v551
    %772 = vmatprep.subr.bf16.mxu0 %v550
    %773 = vmatpush2.bf16.msra.mxu0 %v549
    %774 = vmatprep.mubr.bf16.mxu0 %v197
    %775 = vmatmul.mubr.bf16.gmra.mxu0 %v196
    %v776 = vpop.f32.mrf.mxu0
    %v777 = vadd.f32 %v736, %v776
    %v778 = vpop.f32.mrf.mxu0
    %v779 = vadd.f32 %v738, %v778
    %v780 = vpop.f32.mrf.mxu0
    %v781 = vpop.f32.mrf.mxu0
    %782 = vdwg.mxu0
    %783 = vmatprep.subr.bf16.mxu0 %v580
    %784 = vmatpush1.bf16.msra.mxu0 %v579
    %785 = vmatprep.subr.bf16.mxu0 %v578
    %786 = vmatpush1.bf16.msra.mxu0 %v577
    %787 = vmatprep.subr.bf16.mxu0 %v576
    %788 = vmatpush1.bf16.msra.mxu0 %v575
    %789 = vmatprep.subr.bf16.mxu0 %v574
    %790 = vmatpush1.bf16.msra.mxu0 %v573
    %791 = vmatprep.subr.bf16.mxu0 %v572
    %792 = vmatpush1.bf16.msra.mxu0 %v571
    %793 = vmatprep.subr.bf16.mxu0 %v570
    %794 = vmatpush1.bf16.msra.mxu0 %v569
    %795 = vmatprep.subr.bf16.mxu0 %v568
    %796 = vmatpush1.bf16.msra.mxu0 %v567
    %797 = vmatprep.subr.bf16.mxu0 %v566
    %798 = vmatpush1.bf16.msra.mxu0 %v565
    %799 = vmatprep.subr.bf16.mxu0 %v596
    %800 = vmatpush2.bf16.msra.mxu0 %v595
    %801 = vmatprep.subr.bf16.mxu0 %v594
    %802 = vmatpush2.bf16.msra.mxu0 %v593
    %803 = vmatprep.subr.bf16.mxu0 %v592
    %804 = vmatpush2.bf16.msra.mxu0 %v591
    %805 = vmatprep.subr.bf16.mxu0 %v590
    %806 = vmatpush2.bf16.msra.mxu0 %v589
    %807 = vmatprep.subr.bf16.mxu0 %v588
    %808 = vmatpush2.bf16.msra.mxu0 %v587
    %809 = vmatprep.subr.bf16.mxu0 %v586
    %810 = vmatpush2.bf16.msra.mxu0 %v585
    %811 = vmatprep.subr.bf16.mxu0 %v584
    %812 = vmatpush2.bf16.msra.mxu0 %v583
    %813 = vmatprep.subr.bf16.mxu0 %v582
    %814 = vmatpush2.bf16.msra.mxu0 %v581
    %815 = vmatprep.mubr.bf16.mxu0 %v199
    %816 = vmatmul.mubr.bf16.gmra.mxu0 %v198
    %v817 = vpop.f32.mrf.mxu0
    %v818 = vadd.f32 %v777, %v817
    %v819 = vpop.f32.mrf.mxu0
    %v820 = vadd.f32 %v779, %v819
    %v821 = vpop.f32.mrf.mxu0
    %v822 = vpop.f32.mrf.mxu0
    %823 = vdwg.mxu0
    %824 = vmatprep.subr.bf16.mxu0 0
    %825 = vmatpush1.bf16.msra.mxu0 0
    %826 = vmatprep.subr.bf16.mxu0 0
    %827 = vmatpush1.bf16.msra.mxu0 0
    %828 = vmatprep.subr.bf16.mxu0 0
    %829 = vmatpush1.bf16.msra.mxu0 0
    %830 = vmatprep.subr.bf16.mxu0 0
    %831 = vmatpush1.bf16.msra.mxu0 0
    %832 = vmatprep.subr.bf16.mxu0 0
    %833 = vmatpush1.bf16.msra.mxu0 0
    %834 = vmatprep.subr.bf16.mxu0 0
    %835 = vmatpush1.bf16.msra.mxu0 0
    %836 = vmatprep.subr.bf16.mxu0 0
    %837 = vmatpush1.bf16.msra.mxu0 0
    %838 = vmatprep.subr.bf16.mxu0 %v598
    %839 = vmatpush1.bf16.msra.mxu0 %v597
    %840 = vmatprep.subr.bf16.mxu0 0
    %841 = vmatpush2.bf16.msra.mxu0 0
    %842 = vmatprep.subr.bf16.mxu0 0
    %843 = vmatpush2.bf16.msra.mxu0 0
    %844 = vmatprep.subr.bf16.mxu0 0
    %845 = vmatpush2.bf16.msra.mxu0 0
    %846 = vmatprep.subr.bf16.mxu0 0
    %847 = vmatpush2.bf16.msra.mxu0 0
    %848 = vmatprep.subr.bf16.mxu0 0
    %849 = vmatpush2.bf16.msra.mxu0 0
    %850 = vmatprep.subr.bf16.mxu0 0
    %851 = vmatpush2.bf16.msra.mxu0 0
    %852 = vmatprep.subr.bf16.mxu0 0
    %853 = vmatpush2.bf16.msra.mxu0 0
    %854 = vmatprep.subr.bf16.mxu0 0
    %855 = vmatpush2.bf16.msra.mxu0 0
    %856 = vmatprep.mubr.bf16.mxu0 0
    %857 = vmatmul.mubr.bf16.gmra.mxu0 %v699
    %v858 = vpop.f32.mrf.mxu0
    %v859 = vadd.f32 %v818, %v858
    %v860 = vpop.f32.mrf.mxu0
    %v861 = vadd.f32 %v820, %v860
    %v862 = vpop.f32.mrf.mxu0
    %v863 = vpop.f32.mrf.mxu0
    %864 = vdwg.mxu0
    %vm865 = vcmp.ge.f32.partialorder %v859, 0.0
    %vm866 = vcmp.ge.f32.partialorder %v861, 0.0
    %v867 = vmul.f32 %v859, 0.01
    %v868 = vmul.f32 %v861, 0.01
    %v869 = vsel %vm865, %v859, %v867
    %v870 = vsel %vm866, %v861, %v868
    %v871 = vpack.c.bf16 %v869, %v869
    %v872 = vpack.c.bf16 %v870, %v870
    %v873 = vld [vmem:[#allocation5] sm:$0xff]
    %v874 = vld [vmem:[#allocation5 + $0x8] sm:$0xff]
    %v875 = vld [vmem:[#allocation5 + $0x10] sm:$0xff]
    %v876 = vld [vmem:[#allocation5 + $0x18] sm:$0xff]
    %v877 = vld [vmem:[#allocation5 + $0x20] sm:$0xff]
    %v878 = vld [vmem:[#allocation5 + $0x28] sm:$0xff]
    %v879 = vld [vmem:[#allocation5 + $0x30] sm:$0xff]
    %v880 = vld [vmem:[#allocation5 + $0x38] sm:$0xff]
    %v881 = vld [vmem:[#allocation5 + $0x40] sm:$0xff]
    %v882 = vld [vmem:[#allocation5 + $0x48] sm:$0xff]
    %v883 = vld [vmem:[#allocation5 + $0x50] sm:$0xff]
    %v884 = vld [vmem:[#allocation5 + $0x58] sm:$0xff]
    %v885 = vld [vmem:[#allocation5 + $0x60] sm:$0xff]
    %v886 = vld [vmem:[#allocation5 + $0x68] sm:$0xff]
    %v887 = vld [vmem:[#allocation5 + $0x70] sm:$0xff]
    %v888 = vld [vmem:[#allocation5 + $0x78] sm:$0xff]
    %v889 = vld [vmem:[#allocation5 + $0x80] sm:$0xff]
    %v890 = vld [vmem:[#allocation5 + $0x88] sm:$0xff]
    %v891 = vld [vmem:[#allocation5 + $0x90] sm:$0xff]
    %v892 = vld [vmem:[#allocation5 + $0x98] sm:$0xff]
    %v893 = vld [vmem:[#allocation5 + $0xa0] sm:$0xff]
    %v894 = vld [vmem:[#allocation5 + $0xa8] sm:$0xff]
    %v895 = vld [vmem:[#allocation5 + $0xb0] sm:$0xff]
    %v896 = vld [vmem:[#allocation5 + $0xb8] sm:$0xff]
    %v897 = vld [vmem:[#allocation5 + $0xc0] sm:$0xff]
    %v898 = vld [vmem:[#allocation5 + $0xc8] sm:$0xff]
    %v899 = vld [vmem:[#allocation5 + $0xd0] sm:$0xff]
    %v900 = vld [vmem:[#allocation5 + $0xd8] sm:$0xff]
    %v901 = vld [vmem:[#allocation5 + $0xe0] sm:$0xff]
    %v902 = vld [vmem:[#allocation5 + $0xe8] sm:$0xff]
    %v903 = vld [vmem:[#allocation5 + $0xf0] sm:$0xff]
    %v904 = vld [vmem:[#allocation5 + $0xf8] sm:$0xff]
    %v905 = vld [vmem:[%s4] sm:$0x3]
    %v907 = vlaneseq
    %v908 = vshrl.u32 %v907, 7
    %v909 = vsub.s32 0, %v908
    %v910 = vrot.slane %v905, %v909
    %v911 = vlaneseq
    %v912 = vshrl.u32 %v911, 7
    %v913 = vsub.s32 1, %v912
    %v914 = vrot.slane %v905, %v913
    %v949 = vunpack.c.l.b16 %v873
    %v950 = vunpack.c.h.b16 %v873
    %v951 = vunpack.c.l.b16 %v874
    %v952 = vunpack.c.h.b16 %v874
    %v953 = vunpack.c.l.b16 %v875
    %v954 = vunpack.c.h.b16 %v875
    %v955 = vunpack.c.l.b16 %v876
    %v956 = vunpack.c.h.b16 %v876
    %v957 = vunpack.c.l.b16 %v877
    %v958 = vunpack.c.h.b16 %v877
    %v959 = vunpack.c.l.b16 %v878
    %v960 = vunpack.c.h.b16 %v878
    %v961 = vunpack.c.l.b16 %v879
    %v962 = vunpack.c.h.b16 %v879
    %v963 = vunpack.c.l.b16 %v880
    %v964 = vunpack.c.h.b16 %v880
    %v965 = vunpack.c.l.b16 %v881
    %v966 = vunpack.c.h.b16 %v881
    %v967 = vunpack.c.l.b16 %v882
    %v968 = vunpack.c.h.b16 %v882
    %v969 = vunpack.c.l.b16 %v883
    %v970 = vunpack.c.h.b16 %v883
    %v971 = vunpack.c.l.b16 %v884
    %v972 = vunpack.c.h.b16 %v884
    %v973 = vunpack.c.l.b16 %v885
    %v974 = vunpack.c.h.b16 %v885
    %v975 = vunpack.c.l.b16 %v886
    %v976 = vunpack.c.h.b16 %v886
    %v977 = vunpack.c.l.b16 %v887
    %v978 = vunpack.c.h.b16 %v887
    %v979 = vunpack.c.l.b16 %v888
    %v980 = vunpack.c.h.b16 %v888
    %v981 = vunpack.c.l.b16 %v889
    %v982 = vunpack.c.h.b16 %v889
    %v983 = vunpack.c.l.b16 %v890
    %v984 = vunpack.c.h.b16 %v890
    %v985 = vunpack.c.l.b16 %v891
    %v986 = vunpack.c.h.b16 %v891
    %v987 = vunpack.c.l.b16 %v892
    %v988 = vunpack.c.h.b16 %v892
    %v989 = vunpack.c.l.b16 %v893
    %v990 = vunpack.c.h.b16 %v893
    %v991 = vunpack.c.l.b16 %v894
    %v992 = vunpack.c.h.b16 %v894
    %v993 = vunpack.c.l.b16 %v895
    %v994 = vunpack.c.h.b16 %v895
    %v995 = vunpack.c.l.b16 %v896
    %v996 = vunpack.c.h.b16 %v896
    %v997 = vunpack.c.l.b16 %v897
    %v998 = vunpack.c.h.b16 %v897
    %v999 = vunpack.c.l.b16 %v898
    %v1000 = vunpack.c.h.b16 %v898
    %v1001 = vunpack.c.l.b16 %v899
    %v1002 = vunpack.c.h.b16 %v899
    %v1003 = vunpack.c.l.b16 %v900
    %v1004 = vunpack.c.h.b16 %v900
    %v1005 = vunpack.c.l.b16 %v901
    %v1006 = vunpack.c.h.b16 %v901
    %v1007 = vunpack.c.l.b16 %v902
    %v1008 = vunpack.c.h.b16 %v902
    %v1009 = vunpack.c.l.b16 %v903
    %v1010 = vunpack.c.h.b16 %v903
    %v1011 = vunpack.c.l.b16 %v904
    %v1012 = vunpack.c.h.b16 %v904
    %v1013 = vpack.c.b16 %v951, %v949
    %v1014 = vpack.c.b16 %v952, %v950
    %v1015 = vpack.c.b16 %v955, %v953
    %v1016 = vpack.c.b16 %v956, %v954
    %v1017 = vpack.c.b16 %v959, %v957
    %v1018 = vpack.c.b16 %v960, %v958
    %v1019 = vpack.c.b16 %v963, %v961
    %v1020 = vpack.c.b16 %v964, %v962
    %v1021 = vpack.c.b16 %v967, %v965
    %v1022 = vpack.c.b16 %v968, %v966
    %v1023 = vpack.c.b16 %v971, %v969
    %v1024 = vpack.c.b16 %v972, %v970
    %v1025 = vpack.c.b16 %v975, %v973
    %v1026 = vpack.c.b16 %v976, %v974
    %v1027 = vpack.c.b16 %v979, %v977
    %v1028 = vpack.c.b16 %v980, %v978
    %v1029 = vpack.c.b16 %v983, %v981
    %v1030 = vpack.c.b16 %v984, %v982
    %v1031 = vpack.c.b16 %v987, %v985
    %v1032 = vpack.c.b16 %v988, %v986
    %v1033 = vpack.c.b16 %v991, %v989
    %v1034 = vpack.c.b16 %v992, %v990
    %v1035 = vpack.c.b16 %v995, %v993
    %v1036 = vpack.c.b16 %v996, %v994
    %v1037 = vpack.c.b16 %v999, %v997
    %v1038 = vpack.c.b16 %v1000, %v998
    %v1039 = vpack.c.b16 %v1003, %v1001
    %v1040 = vpack.c.b16 %v1004, %v1002
    %v1041 = vpack.c.b16 %v1007, %v1005
    %v1042 = vpack.c.b16 %v1008, %v1006
    %v1043 = vpack.c.b16 %v1011, %v1009
    %v1044 = vpack.c.b16 %v1012, %v1010
    %1077 = vmatprep.subr.bf16.mxu0 %v1028
    %1078 = vmatpush1.bf16.msra.mxu0 %v1027
    %1079 = vmatprep.subr.bf16.mxu0 %v1026
    %1080 = vmatpush1.bf16.msra.mxu0 %v1025
    %1081 = vmatprep.subr.bf16.mxu0 %v1024
    %1082 = vmatpush1.bf16.msra.mxu0 %v1023
    %1083 = vmatprep.subr.bf16.mxu0 %v1022
    %1084 = vmatpush1.bf16.msra.mxu0 %v1021
    %1085 = vmatprep.subr.bf16.mxu0 %v1020
    %1086 = vmatpush1.bf16.msra.mxu0 %v1019
    %1087 = vmatprep.subr.bf16.mxu0 %v1018
    %1088 = vmatpush1.bf16.msra.mxu0 %v1017
    %1089 = vmatprep.subr.bf16.mxu0 %v1016
    %1090 = vmatpush1.bf16.msra.mxu0 %v1015
    %1091 = vmatprep.subr.bf16.mxu0 %v1014
    %1092 = vmatpush1.bf16.msra.mxu0 %v1013
    %1093 = vmatprep.subr.bf16.mxu0 %v1044
    %1094 = vmatpush2.bf16.msra.mxu0 %v1043
    %1095 = vmatprep.subr.bf16.mxu0 %v1042
    %1096 = vmatpush2.bf16.msra.mxu0 %v1041
    %1097 = vmatprep.subr.bf16.mxu0 %v1040
    %1098 = vmatpush2.bf16.msra.mxu0 %v1039
    %1099 = vmatprep.subr.bf16.mxu0 %v1038
    %1100 = vmatpush2.bf16.msra.mxu0 %v1037
    %1101 = vmatprep.subr.bf16.mxu0 %v1036
    %1102 = vmatpush2.bf16.msra.mxu0 %v1035
    %1103 = vmatprep.subr.bf16.mxu0 %v1034
    %1104 = vmatpush2.bf16.msra.mxu0 %v1033
    %1105 = vmatprep.subr.bf16.mxu0 %v1032
    %1106 = vmatpush2.bf16.msra.mxu0 %v1031
    %1107 = vmatprep.subr.bf16.mxu0 %v1030
    %1108 = vmatpush2.bf16.msra.mxu0 %v1029
    %1109 = vmatprep.mubr.bf16.mxu0 %v872
    %1110 = vmatmul.mubr.bf16.gmra.mxu0 %v871
    %v1111 = vpop.f32.mrf.mxu0
    %v1112 = vadd.f32 %v910, %v1111
    %v1113 = vpop.f32.mrf.mxu0
    %v1114 = vadd.f32 %v914, %v1113
    %v1115 = vpop.f32.mrf.mxu0
    %v1116 = vpop.f32.mrf.mxu0
    %1117 = vdwg.mxu0
    %vm1118 = vcmp.ge.f32.partialorder %v1112, 0.0
    %vm1119 = vcmp.ge.f32.partialorder %v1114, 0.0
    %v1120 = vmul.f32 %v1112, 0.01
    %v1121 = vmul.f32 %v1114, 0.01
    %v1122 = vsel %vm1118, %v1112, %v1120
    %v1123 = vsel %vm1119, %v1114, %v1121
    %v1124 = vpack.c.bf16 %v1122, %v1122
    %v1125 = vpack.c.bf16 %v1123, %v1123
    %v1126 = vld [vmem:[#allocation7] sm:$0xf]
    %v1127 = vld [vmem:[#allocation7 + $0x4] sm:$0xf]
    %v1128 = vld [vmem:[#allocation7 + $0x8] sm:$0xf]
    %v1129 = vld [vmem:[#allocation7 + $0xc] sm:$0xf]
    %v1130 = vld [vmem:[#allocation7 + $0x10] sm:$0xf]
    %v1131 = vld [vmem:[#allocation7 + $0x14] sm:$0xf]
    %v1132 = vld [vmem:[#allocation7 + $0x18] sm:$0xf]
    %v1133 = vld [vmem:[#allocation7 + $0x1c] sm:$0xf]
    %v1134 = vld [vmem:[#allocation7 + $0x20] sm:$0xf]
    %v1135 = vld [vmem:[#allocation7 + $0x24] sm:$0xf]
    %v1136 = vld [vmem:[#allocation7 + $0x28] sm:$0xf]
    %v1137 = vld [vmem:[#allocation7 + $0x2c] sm:$0xf]
    %v1138 = vld [vmem:[#allocation7 + $0x30] sm:$0xf]
    %v1139 = vld [vmem:[#allocation7 + $0x34] sm:$0xf]
    %v1140 = vld [vmem:[#allocation7 + $0x38] sm:$0xf]
    %v1141 = vld [vmem:[#allocation7 + $0x3c] sm:$0xf]
    %v1142 = vld [vmem:[#allocation7 + $0x40] sm:$0xf]
    %v1143 = vld [vmem:[#allocation7 + $0x44] sm:$0xf]
    %v1144 = vld [vmem:[#allocation7 + $0x48] sm:$0xf]
    %v1145 = vld [vmem:[#allocation7 + $0x4c] sm:$0xf]
    %v1146 = vld [vmem:[#allocation7 + $0x50] sm:$0xf]
    %v1147 = vld [vmem:[#allocation7 + $0x54] sm:$0xf]
    %v1148 = vld [vmem:[#allocation7 + $0x58] sm:$0xf]
    %v1149 = vld [vmem:[#allocation7 + $0x5c] sm:$0xf]
    %v1150 = vld [vmem:[#allocation7 + $0x60] sm:$0xf]
    %v1151 = vld [vmem:[#allocation7 + $0x64] sm:$0xf]
    %v1152 = vld [vmem:[#allocation7 + $0x68] sm:$0xf]
    %v1153 = vld [vmem:[#allocation7 + $0x6c] sm:$0xf]
    %v1154 = vld [vmem:[#allocation7 + $0x70] sm:$0xf]
    %v1155 = vld [vmem:[#allocation7 + $0x74] sm:$0xf]
    %v1156 = vld [vmem:[#allocation7 + $0x78] sm:$0xf]
    %v1157 = vld [vmem:[#allocation7 + $0x7c] sm:$0xf]
    %v1158 = vld [vmem:[%s6] sm:$0x1]
    %v1160 = vlaneseq
    %v1161 = vshrl.u32 %v1160, 7
    %v1162 = vsub.s32 0, %v1161
    %v1163 = vrot.slane %v1158, %v1162
    %v1197 = vunpack.c.l.b16 %v1126
    %v1198 = vunpack.c.l.b16 %v1127
    %v1199 = vunpack.c.l.b16 %v1128
    %v1200 = vunpack.c.l.b16 %v1129
    %v1201 = vunpack.c.l.b16 %v1130
    %v1202 = vunpack.c.l.b16 %v1131
    %v1203 = vunpack.c.l.b16 %v1132
    %v1204 = vunpack.c.l.b16 %v1133
    %v1205 = vunpack.c.l.b16 %v1134
    %v1206 = vunpack.c.l.b16 %v1135
    %v1207 = vunpack.c.l.b16 %v1136
    %v1208 = vunpack.c.l.b16 %v1137
    %v1209 = vunpack.c.l.b16 %v1138
    %v1210 = vunpack.c.l.b16 %v1139
    %v1211 = vunpack.c.l.b16 %v1140
    %v1212 = vunpack.c.l.b16 %v1141
    %v1213 = vunpack.c.l.b16 %v1142
    %v1214 = vunpack.c.l.b16 %v1143
    %v1215 = vunpack.c.l.b16 %v1144
    %v1216 = vunpack.c.l.b16 %v1145
    %v1217 = vunpack.c.l.b16 %v1146
    %v1218 = vunpack.c.l.b16 %v1147
    %v1219 = vunpack.c.l.b16 %v1148
    %v1220 = vunpack.c.l.b16 %v1149
    %v1221 = vunpack.c.l.b16 %v1150
    %v1222 = vunpack.c.l.b16 %v1151
    %v1223 = vunpack.c.l.b16 %v1152
    %v1224 = vunpack.c.l.b16 %v1153
    %v1225 = vunpack.c.l.b16 %v1154
    %v1226 = vunpack.c.l.b16 %v1155
    %v1227 = vunpack.c.l.b16 %v1156
    %v1228 = vunpack.c.l.b16 %v1157
    %v1229 = vpack.c.b16 %v1198, %v1197
    %v1230 = vpack.c.b16 %v1200, %v1199
    %v1231 = vpack.c.b16 %v1202, %v1201
    %v1232 = vpack.c.b16 %v1204, %v1203
    %v1233 = vpack.c.b16 %v1206, %v1205
    %v1234 = vpack.c.b16 %v1208, %v1207
    %v1235 = vpack.c.b16 %v1210, %v1209
    %v1236 = vpack.c.b16 %v1212, %v1211
    %v1237 = vpack.c.b16 %v1214, %v1213
    %v1238 = vpack.c.b16 %v1216, %v1215
    %v1239 = vpack.c.b16 %v1218, %v1217
    %v1240 = vpack.c.b16 %v1220, %v1219
    %v1241 = vpack.c.b16 %v1222, %v1221
    %v1242 = vpack.c.b16 %v1224, %v1223
    %v1243 = vpack.c.b16 %v1226, %v1225
    %v1244 = vpack.c.b16 %v1228, %v1227
    %1261 = vmatprep.subr.bf16.mxu0 0
    %1262 = vmatpush1.bf16.msra.mxu0 %v1236
    %1263 = vmatprep.subr.bf16.mxu0 0
    %1264 = vmatpush1.bf16.msra.mxu0 %v1235
    %1265 = vmatprep.subr.bf16.mxu0 0
    %1266 = vmatpush1.bf16.msra.mxu0 %v1234
    %1267 = vmatprep.subr.bf16.mxu0 0
    %1268 = vmatpush1.bf16.msra.mxu0 %v1233
    %1269 = vmatprep.subr.bf16.mxu0 0
    %1270 = vmatpush1.bf16.msra.mxu0 %v1232
    %1271 = vmatprep.subr.bf16.mxu0 0
    %1272 = vmatpush1.bf16.msra.mxu0 %v1231
    %1273 = vmatprep.subr.bf16.mxu0 0
    %1274 = vmatpush1.bf16.msra.mxu0 %v1230
    %1275 = vmatprep.subr.bf16.mxu0 0
    %1276 = vmatpush1.bf16.msra.mxu0 %v1229
    %1277 = vmatprep.subr.bf16.mxu0 0
    %1278 = vmatpush2.bf16.msra.mxu0 %v1244
    %1279 = vmatprep.subr.bf16.mxu0 0
    %1280 = vmatpush2.bf16.msra.mxu0 %v1243
    %1281 = vmatprep.subr.bf16.mxu0 0
    %1282 = vmatpush2.bf16.msra.mxu0 %v1242
    %1283 = vmatprep.subr.bf16.mxu0 0
    %1284 = vmatpush2.bf16.msra.mxu0 %v1241
    %1285 = vmatprep.subr.bf16.mxu0 0
    %1286 = vmatpush2.bf16.msra.mxu0 %v1240
    %1287 = vmatprep.subr.bf16.mxu0 0
    %1288 = vmatpush2.bf16.msra.mxu0 %v1239
    %1289 = vmatprep.subr.bf16.mxu0 0
    %1290 = vmatpush2.bf16.msra.mxu0 %v1238
    %1291 = vmatprep.subr.bf16.mxu0 0
    %1292 = vmatpush2.bf16.msra.mxu0 %v1237
    %1293 = vmatprep.mubr.bf16.mxu0 %v1125
    %1294 = vmatmul.mubr.bf16.gmra.mxu0 %v1124
    %v1295 = vpop.f32.mrf.mxu0
    %v1296 = vadd.f32 %v1163, %v1295
    %v1297 = vpop.f32.mrf.mxu0
    %v1298 = vpop.f32.mrf.mxu0
    %v1299 = vpop.f32.mrf.mxu0
    %1300 = vdwg.mxu0
    %vm1301 = vcmp.ge.f32.partialorder %v1296, 0.0
    %v1302 = vmul.f32 %v1296, 0.01
    %v1303 = vsel %vm1301, %v1296, %v1302
    %1304 = vst [vmem:[#allocation8] sm:$0xff] %v1303
    // Predicated region
    $region42: #{mlp_forward.1} parent=1 // pred_check
      _
    $region43: #{mlp_forward.1} parent=1 // pred_check_branch
      %1306 = sbr.rel (0) target = $region45
    $region44: #{mlp_forward.1} parent=1 // pred_region
      %s1308 = ssub.s32 128, 128
      %1309 = vsyncadd [#allocation4], %s1308
      %s1311 = sshll.u32 [#allocation8], 4
      %s1312 = int_to_ptr.vmem [resolvable:$true] %s1311
      %1314 = dma.vmem_to_hbm [thread:$0]  %s1312, 128, %s7, [#allocation4]
    $region45: #{mlp_forward.1} parent=1 // pred_fallthru
      _
    // Predicated region
    $region46: #{mlp_forward.1} parent=1 // pred_check
      _
    $region47: #{mlp_forward.1} parent=1 // pred_check_branch
      %1316 = sbr.rel (0) target = $region49
    $region48: #{mlp_forward.1} parent=1 // pred_region
      %1317 = dma.done [#allocation4], 128
    $region49: #{mlp_forward.1} parent=1 // pred_fallthru
      _
    %1318 = vsyncpa [#allocation3], 1
    %1319 = vsyncpa [#allocation6], 1
    %1320 = vsyncpa [#allocation4], 1

</llo_original>
